<compile_context>
chip_gen: v6e
topology: v6e:2x2x1
jax: 0.10.0
libtpu: 0.0.40
codegen_flags: <defaults>
</compile_context>

<pallas_src>
import jax
import jax.numpy as jnp
from jax.experimental import pallas as pl
from jax.experimental.pallas import tpu as pltpu


def _round_up(n: int, m: int) -> int:
    return ((n + m - 1) // m) * m


def _cdiv(a: int, b: int) -> int:
    return -(-a // b)


def _vmem_capacity_bytes() -> int:
    """Generation-aware VMEM size (128 MiB v5e/v6e, 64 MiB per TC on v7x)."""
    try:
        cap = int(getattr(pltpu.get_tpu_info(), "vmem_capacity_bytes", 0))
        if cap > 0:
            return cap
    except Exception:
        pass
    return 64 * 1024 * 1024  # conservative fallback (v7x per-TensorCore)


def _per_mode_tile_bytes(tb: int, K: int, Nout: int, in_isz: int, in_sub: int) -> int:
    """VMEM bytes per mode of the pipelined tiles, counting real layout:
    lane dims rounded to 128, sublane dims to the dtype granule, plus the
    f32 matmul result tile that is live before the store."""
    lane = 128
    x_b = _round_up(tb, in_sub) * _round_up(K, lane) * in_isz
    w_b = _round_up(K, in_sub) * _round_up(Nout, lane) * in_isz
    o_b = _round_up(tb, 8) * _round_up(Nout, lane) * 4          # f32 output tile
    acc = o_b                                                    # live matmul result
    return 2 * (x_b + w_b + o_b) + acc                           # 2x = double buffering


def _spectral_mul_kernel(x_ref, w_ref, o_ref):
    """One batched MXU matmul per block: 'mbk,mkn->mbn', f32 accumulation.

    x_ref: (tm, tb, K)   w_ref: (tm, K, Nout)   o_ref: (tm, tb, Nout)
    Real/imag are packed along K (LHS) and Nout (RHS/OUT), so the complex
    multiply is a single dot_general — no VPU recombine passes.
    """
    o_ref[...] = jax.lax.dot_general(
        x_ref[...], w_ref[...],
        dimension_numbers=(((2,), (1,)), ((0,), (0,))),
        preferred_element_type=jnp.float32,
    ).astype(o_ref.dtype)


def spectral_compl_mul1d(x_pk, w_pk, *, mode_tile, batch_tile, vmem_limit_bytes):
    """Pallas wrapper for the packed complex channel-mixing contraction.

    x_pk: (M_pad, B_pad, K)   w_pk: (M_pad, K, Nout)
    returns (M_pad, B_pad, Nout) float32 with [real | imag] packed along lanes.
    """
    M_pad, B_pad, K = x_pk.shape
    Nout = w_pk.shape[-1]
    tm, tb = mode_tile, batch_tile
    grid = (M_pad // tm, B_pad // tb)

    isz = jnp.dtype(x_pk.dtype).itemsize
    cost = pl.CostEstimate(
        flops=2 * M_pad * B_pad * K * Nout,
        transcendentals=0,
        bytes_accessed=(M_pad * B_pad * K * isz           # x
                        + M_pad * K * Nout * isz          # w
                        + M_pad * B_pad * Nout * 4),      # out (f32)
    )

    return pl.pallas_call(
        _spectral_mul_kernel,
        out_shape=jax.ShapeDtypeStruct((M_pad, B_pad, Nout), jnp.float32),
        grid=grid,
        in_specs=[
            # x tile streams over (mode-block, batch-block).
            pl.BlockSpec((tm, tb, K), lambda m, b: (m, b, 0)),
            # Weight tile depends only on the mode block -> no re-DMA while
            # the inner batch axis varies (weights stay resident in VMEM).
            pl.BlockSpec((tm, K, Nout), lambda m, b: (m, 0, 0)),
        ],
        out_specs=pl.BlockSpec((tm, tb, Nout), lambda m, b: (m, b, 0)),
        compiler_params=pltpu.CompilerParams(
            # C_in is contracted inside the block -> no grid reduction axis:
            # both axes are parallel (shards across v7x's 2 TensorCores).
            dimension_semantics=("parallel", "parallel"),
            vmem_limit_bytes=int(vmem_limit_bytes),
        ),
        cost_estimate=cost,
    )(x_pk, w_pk)


def spectral_conv1d(x, w_real, w_imag, modes1, *, compute_dtype=jnp.bfloat16):
    """Forward pass of SpectralConv1d (PyTorch semantics, NCW layout).

    x:               (B, C_in, N) float32
    w_real / w_imag: (C_in, C_out, modes1) float32 (split complex weights)
    returns:         (B, C_out, N) float32

    compute_dtype=bfloat16 (default) halves x/w HBM+VMEM bytes and avoids the
    f32 MXU multi-pass decomposition; accumulation stays float32.  Pass
    jnp.float32 for bit-tighter accuracy.
    """
    B, Ci, N = x.shape
    Co = w_real.shape[1]
    n_freq = N // 2 + 1
    M = int(modes1)
    if M > n_freq:
        raise ValueError(f"modes1={M} exceeds N//2+1={n_freq}")

    # TODO(synk): rfft/irfft have no Pallas equivalent; they stay in plain JAX.
    x_ft = jnp.fft.rfft(x.astype(jnp.float32), axis=-1)      # (B, Ci, n_freq)
    x_lo = x_ft[:, :, :M]                                     # (B, Ci, M)

    # ---- padded, mode-major, real/imag lane-packed layout -----------------
    in_isz = jnp.dtype(compute_dtype).itemsize
    sub = 16 if in_isz < 4 else 8            # sublane granule (bf16 packs 16)

    # Pad channels so K = 2*Ci_pad and Nout = 2*Co_pad are multiples of 128:
    # full MXU contraction depth, unmasked vld, lane-dense unmasked vst.
    # NOTE: for very small true Ci (<=16) the MXU path is weight-push bound
    # and a VPU broadcast-reduce could win; benchmark that regime if it matters.
    Ci_pad = _round_up(Ci, 64)
    Co_pad = _round_up(Co, 64)
    K, Nout = 2 * Ci_pad, 2 * Co_pad

    B_pad0 = _round_up(B, sub)
    tb = min(B_pad0, 256)                    # MXU M dim; >=128 whenever B allows
    B_pad = _round_up(B_pad0, tb)

    # Generation-aware VMEM / tile budgets.
    cap = _vmem_capacity_bytes()
    vmem_limit = max(32 * 1024 * 1024,
                     min((3 * cap) // 4, 100 * 1024 * 1024))   # ~96MiB v5e/v6e, 48MiB v7x
    tile_budget = min(vmem_limit // 2, 48 * 1024 * 1024)       # ~48MiB / 24MiB

    per_mode = _per_mode_tile_bytes(tb, K, Nout, in_isz, sub)
    tm = int(max(1, min(M, tile_budget // per_mode)))
    n_bblocks = B_pad // tb
    if n_bblocks == 1 and M >= 2:
        # Both grid axes are "parallel": with a single batch block keep an
        # even (>=2) number of mode blocks so v7x's 2 TensorCores both get
        # work (costs only ~0.35us/extra step on v5e/v6e).
        n_mblocks = max(2, _cdiv(M, tm))
        if n_mblocks % 2:
            n_mblocks += 1
        tm = _cdiv(M, n_mblocks)
        M_pad = tm * n_mblocks
    else:
        M_pad = _round_up(M, tm)

    # LHS: [xr | xi] packed along the contraction (lane) dim -> (M, B, 2*Ci).
    xr = jnp.transpose(jnp.real(x_lo), (2, 0, 1))             # (M, B, Ci)
    xi = jnp.transpose(jnp.imag(x_lo), (2, 0, 1))
    pad_x = ((0, M_pad - M), (0, B_pad - B), (0, Ci_pad - Ci))
    x_pk = jnp.concatenate([jnp.pad(xr, pad_x), jnp.pad(xi, pad_x)],
                           axis=-1).astype(compute_dtype)      # (M_pad, B_pad, K)

    # RHS packed host-side: per-mode 2x2 real block of the complex weight,
    #   [[ wr,  wi],
    #    [-wi,  wr]]   -> (M_pad, 2*Ci_pad, 2*Co_pad)
    wr = jnp.transpose(w_real, (2, 0, 1))                      # (M, Ci, Co)
    wi = jnp.transpose(w_imag, (2, 0, 1))
    pad_w = ((0, M_pad - M), (0, Ci_pad - Ci), (0, Co_pad - Co))
    wr = jnp.pad(wr, pad_w)
    wi = jnp.pad(wi, pad_w)
    w_pk = jnp.concatenate(
        [jnp.concatenate([wr, wi], axis=-1),
         jnp.concatenate([-wi, wr], axis=-1)],
        axis=-2).astype(compute_dtype)                          # (M_pad, K, Nout)

    out_pk = spectral_compl_mul1d(x_pk, w_pk, mode_tile=tm, batch_tile=tb,
                                  vmem_limit_bytes=vmem_limit)

    # ---- unpack, rebuild the (zero high-mode) spectrum, inverse FFT -------
    out_r = out_pk[:M, :B, :Co]
    out_i = out_pk[:M, :B, Co_pad:Co_pad + Co]
    out_lo = jnp.transpose(out_r + 1j * out_i, (1, 2, 0)).astype(jnp.complex64)
    out_ft = jnp.pad(out_lo, ((0, 0), (0, 0), (0, n_freq - M)))
    return jnp.fft.irfft(out_ft, n=N, axis=-1).astype(jnp.float32)


def _reference_spectral_conv1d(x, w_real, w_imag, modes1):
    """Pure-JAX reference matching the PyTorch module exactly."""
    B, Ci, N = x.shape
    Co = w_real.shape[1]
    x_ft = jnp.fft.rfft(x, axis=-1)
    w = (w_real + 1j * w_imag).astype(jnp.complex64)
    out_lo = jnp.einsum('bix,iox->box', x_ft[:, :, :modes1], w)
    out_ft = jnp.zeros((B, Co, N // 2 + 1), dtype=jnp.complex64)
    out_ft = out_ft.at[:, :, :modes1].set(out_lo)
    return jnp.fft.irfft(out_ft, n=N, axis=-1)


if __name__ == "__main__":
    # Small shapes consistent with the module's forward (NCW layout).
    B, C_in, C_out, N, modes1 = 2, 4, 4, 16, 8

    key = jax.random.PRNGKey(0)
    kx, kwr, kwi = jax.random.split(key, 3)

    x = jax.random.normal(kx, (B, C_in, N), dtype=jnp.float32)

    # weights1 = scale * rand(C_in, C_out, modes1, dtype=cfloat)
    scale = 1.0 / (C_in * C_out)
    w_real = scale * jax.random.uniform(kwr, (C_in, C_out, modes1), dtype=jnp.float32)
    w_imag = scale * jax.random.uniform(kwi, (C_in, C_out, modes1), dtype=jnp.float32)

    ref = jax.block_until_ready(_reference_spectral_conv1d(x, w_real, w_imag, modes1))

    # Tight check of the kernel math with f32 inputs (only MXU pass decomposition noise).
    out_f32 = jax.block_until_ready(
        spectral_conv1d(x, w_real, w_imag, modes1, compute_dtype=jnp.float32))
    assert out_f32.shape == (B, C_out, N), out_f32.shape
    assert jnp.allclose(out_f32, ref, atol=2e-3, rtol=2e-3), "f32 mismatch vs reference"

    # Default bf16 path (MXU-friendly); looser tolerance for input rounding.
    out_bf16 = jax.block_until_ready(spectral_conv1d(x, w_real, w_imag, modes1))
    assert out_bf16.shape == (B, C_out, N), out_bf16.shape
    assert jnp.allclose(out_bf16, ref, atol=5e-2, rtol=5e-2), "bf16 mismatch vs reference"

    print("KERNEL_OK")
</pallas_src>

<mosaic_0001>
module attributes {stable_mosaic.version = 11 : i64} {
  func.func @_spectral_mul_kernel(%arg0: i32, %arg1: i32, %arg2: memref<4x8x128xf32, #tpu.memory_space<vmem>>, %arg3: memref<4x128x128xf32, #tpu.memory_space<vmem>>, %arg4: memref<4x8x128xf32, #tpu.memory_space<vmem>>) attributes {dimension_semantics = [#tpu.dimension_semantics<parallel>, #tpu.dimension_semantics<parallel>], iteration_bounds = array<i64: 2, 1>, scalar_prefetch = 0 : i64, scratch_operands = 0 : i64, tpu.core_type = #tpu.core_type<tc>, window_params = [{transform_indices = @transform_0, window_bounds = array<i64: 4, 8, 128>}, {transform_indices = @transform_1, window_bounds = array<i64: 4, 128, 128>}, {transform_indices = @transform_2, window_bounds = array<i64: 4, 8, 128>}]} {
    %c0 = arith.constant 0 : index
    %c0_0 = arith.constant 0 : index
    %c0_1 = arith.constant 0 : index
    %0 = vector.load %arg2[%c0, %c0_0, %c0_1] : memref<4x8x128xf32, #tpu.memory_space<vmem>>, vector<4x8x128xf32>
    %c0_2 = arith.constant 0 : index
    %c0_3 = arith.constant 0 : index
    %c0_4 = arith.constant 0 : index
    %1 = vector.load %arg3[%c0_2, %c0_3, %c0_4] : memref<4x128x128xf32, #tpu.memory_space<vmem>>, vector<4x128x128xf32>
    %cst = arith.constant dense<0.000000e+00> : vector<4x8x128xf32>
    %2 = tpu.matmul %0, %1, %cst {dimension_numbers = #tpu.dot_dimension_numbers<[2], [1], [1], [2], [0, 0, 0, 1, 1, 2], [0], [0]>} : vector<4x8x128xf32>, vector<4x128x128xf32>, vector<4x8x128xf32> -> vector<4x8x128xf32>
    %c0_5 = arith.constant 0 : index
    %c0_6 = arith.constant 0 : index
    %c0_7 = arith.constant 0 : index
    %3 = vector.load %arg4[%c0_5, %c0_6, %c0_7] : memref<4x8x128xf32, #tpu.memory_space<vmem>>, vector<4x8x128xf32>
    tpu.vector_store %arg4[%c0_5, %c0_6, %c0_7], %2 {strides = array<i32>} : memref<4x8x128xf32, #tpu.memory_space<vmem>>, vector<4x8x128xf32>,
    return
  }
  func.func @transform_0(%arg0: i32, %arg1: i32) -> (i32, i32, i32) {
    %c0_i32 = arith.constant 0 : i32
    %c0_i32_0 = arith.constant 0 : i32
    return %arg0, %arg1, %c0_i32 : i32, i32, i32
  }
  func.func @transform_1(%arg0: i32, %arg1: i32) -> (i32, i32, i32) {
    %c0_i32 = arith.constant 0 : i32
    %c0_i32_0 = arith.constant 0 : i32
    %c0_i32_1 = arith.constant 0 : i32
    return %arg0, %c0_i32, %c0_i32_0 : i32, i32, i32
  }
  func.func @transform_2(%arg0: i32, %arg1: i32) -> (i32, i32, i32) {
    %c0_i32 = arith.constant 0 : i32
    %c0_i32_0 = arith.constant 0 : i32
    return %arg0, %arg1, %c0_i32 : i32, i32, i32
  }
}

</mosaic_0001>

<llo_original>
// kernel: tpu_custom_call.1
$region0: #{tpu_custom_call.1}
  #allocation0 [shape = 'u32[]', space=smem, size = 0x4, offset = 0x4, fixed_abs, tag = 'smem constant byte address 0x4 - core index']
  #allocation1 [shape = 'u32[144,128]{1,0:T(1,128)}', space=vmem, size = 0x12000, scoped, tag = 'internal scratch']
  %s0 = inlined_call_operand.hbm [shape: f32[8,8,128], index: 0, kind: input, shape index: {}]
  %s1 = inlined_call_operand.hbm [shape: f32[8,128,128], index: 1, kind: input, shape index: {}]
  %s2 = inlined_call_operand.hbm [shape: f32[8,8,128], index: 2, kind: output, shape index: {}]
  %s3 = sld [smem:[#allocation0]]
  $region49: #{tpu_custom_call.1} parent=0
    _
  %s5 = ssub.s32 1, %s3
  %s6 = scalar_select 0, %s5, %s3
  $region1: #{tpu_custom_call.1} parent=0
    #allocation2 [shape = 'u8[32768]{0}', space=vmem, size = 0x8000, scoped, tag = 'input window, operand 0']
    #allocation3 [shape = 's32[2]{0}', space=sflag, size = 0x8, scoped, tag = 'scoped memory for tpu_custom_call.1']
    #allocation4 [shape = 's32[2]{0}', space=sflag, size = 0x8, scoped, tag = 'scoped memory for tpu_custom_call.1']
    #allocation5 [shape = 'u8[524288]{0}', space=vmem, size = 0x80000, scoped, tag = 'input window, operand 1']
    #allocation6 [shape = 's32[2]{0}', space=sflag, size = 0x8, scoped, tag = 'scoped memory for tpu_custom_call.1']
    #allocation7 [shape = 'u8[32768]{0}', space=vmem, size = 0x8000, scoped, tag = 'output window, operand 0']
    %7 = vsyncpa [#allocation3], 0
    %s8 = scalar_lea.sflag [#allocation3], 1
    %9 = vsyncpa %s8, 0
    %10 = vsyncpa [#allocation6], 0
    %s11 = scalar_lea.sflag [#allocation6], 1
    %12 = vsyncpa %s11, 0
    %13 = vsyncpa [#allocation4], 0
    %s14 = scalar_lea.sflag [#allocation4], 1
    %15 = vsyncpa %s14, 0
    loop: start=0, step=1, limit=4
    $region2: #{tpu_custom_call.1} parent=1 // loop_pre_header
      _
    $region3: #{tpu_custom_call.1} parent=1 // loop_header
      %s17 = sphi 0, %s21
      %p18 = scmp.ge.s32.totalorder %s17, 4
      %s24 = sphi 0, %s36
      %s25 = sphi 0, %s32
      %s26 = sphi 0, %s24
      %s27 = sphi 0, %s25
      %s28 = sphi 0, %s26
      %s29 = sphi 0, %s27
      %s41 = sphi 0, %s43
      %s44 = sphi 0, %s41
      %s45 = sphi 0, %s44
      %s61 = sphi 0, %s45
      %s67 = sphi 0, %s69
      %s70 = sphi 0, %s67
      %s71 = sphi 0, %s70
      %s87 = sphi 0, %s71
      %s95 = sphi 0, %s97
      %s98 = sphi 0, %s95
      %s99 = sphi 0, %s98
      %s115 = sphi 0, %s99
    $region4: #{tpu_custom_call.1} parent=1 // loop_header_branch
      %20 = sbr.rel (%p18) target = $region8
    $region5: #{tpu_custom_call.1} parent=1 // loop_body
      %s22 = ssub.s32 %s17, 1
      %s23 = ssub.s32 %s17, 2
      %s30 = sadd.s32 1, %s25
      %p31 = scmp.ge.s32.totalorder %s30, 1
      %s32 = scalar_select %p31, 0, %s30
      %s33 = sadd.s32 1, %s24
      %s34 = scalar_select %p31, %s33, %s24
      %p35 = scmp.ge.s32.totalorder %s34, 2
      %s36 = scalar_select %p35, 0, %s34
      %s37 = ssub.s32 %s24, %s36
      %s38 = ssub.s32 %s25, %s32
      %s39 = sor.u32 %s37, %s38
      %p40 = scmp.eq.s32.totalorder %s39, 0
      %s42 = sadd.s32 %s41, 1
      %s43 = scalar_select %p40, %s41, %s42
      %p46 = pneg %p40
      %p47 = scmp.eq.s32.totalorder %s17, 1
      %p48 = por %p46, %p47
      %p49 = scmp.ne.s32.totalorder %s41, %s44
      %p50 = scmp.eq.s32.totalorder %s17, 0
      %p51 = por %p49, %p50
      %p52 = scmp.ne.s32.totalorder %s41, %s44
      %p53 = scmp.eq.s32.totalorder %s22, 1
      %p54 = por %p52, %p53
      %p55 = scmp.ne.s32.totalorder %s44, %s45
      %p56 = scmp.eq.s32.totalorder %s22, 0
      %p57 = por %p55, %p56
      %p58 = scmp.ne.s32.totalorder %s44, %s45
      %p59 = scmp.eq.s32.totalorder %s23, 1
      %p60 = por %p58, %p59
      %p62 = scmp.ne.s32.totalorder %s45, %s61
      %p63 = scmp.eq.s32.totalorder %s23, 0
      %p64 = por %p62, %p63
      %s65 = ssub.s32 %s24, %s36
      %p66 = scmp.eq.s32.totalorder %s65, 0
      %s68 = sadd.s32 %s67, 1
      %s69 = scalar_select %p66, %s67, %s68
      %p72 = pneg %p66
      %p73 = scmp.eq.s32.totalorder %s17, 1
      %p74 = por %p72, %p73
      %p75 = scmp.ne.s32.totalorder %s67, %s70
      %p76 = scmp.eq.s32.totalorder %s17, 0
      %p77 = por %p75, %p76
      %p78 = scmp.ne.s32.totalorder %s67, %s70
      %p79 = scmp.eq.s32.totalorder %s22, 1
      %p80 = por %p78, %p79
      %p81 = scmp.ne.s32.totalorder %s70, %s71
      %p82 = scmp.eq.s32.totalorder %s22, 0
      %p83 = por %p81, %p82
      %p84 = scmp.ne.s32.totalorder %s70, %s71
      %p85 = scmp.eq.s32.totalorder %s23, 1
      %p86 = por %p84, %p85
      %p88 = scmp.ne.s32.totalorder %s71, %s87
      %p89 = scmp.eq.s32.totalorder %s23, 0
      %p90 = por %p88, %p89
      %s91 = ssub.s32 %s24, %s36
      %s92 = ssub.s32 %s25, %s32
      %s93 = sor.u32 %s91, %s92
      %p94 = scmp.eq.s32.totalorder %s93, 0
      %s96 = sadd.s32 %s95, 1
      %s97 = scalar_select %p94, %s95, %s96
      %p100 = pneg %p94
      %p101 = scmp.eq.s32.totalorder %s17, 1
      %p102 = por %p100, %p101
      %p103 = scmp.ne.s32.totalorder %s95, %s98
      %p104 = scmp.eq.s32.totalorder %s17, 0
      %p105 = por %p103, %p104
      %p106 = scmp.ne.s32.totalorder %s95, %s98
      %p107 = scmp.eq.s32.totalorder %s22, 1
      %p108 = por %p106, %p107
      %p109 = scmp.ne.s32.totalorder %s98, %s99
      %p110 = scmp.eq.s32.totalorder %s22, 0
      %p111 = por %p109, %p110
      %p112 = scmp.ne.s32.totalorder %s98, %s99
      %p113 = scmp.eq.s32.totalorder %s23, 1
      %p114 = por %p112, %p113
      %p116 = scmp.ne.s32.totalorder %s99, %s115
      %p117 = scmp.eq.s32.totalorder %s23, 0
      %p118 = por %p116, %p117
      %p119 = scmp.le.s32.totalorder 1, %s17
      %p120 = scmp.lt.s32.totalorder %s17, 3
      %p121 = pnand %p119, %p120
      %p122 = pneg %p121
      // Predicated region
      $region9: #{tpu_custom_call.1} parent=5 // pred_check
        _
      $region10: #{tpu_custom_call.1} parent=5 // pred_check_branch
        %124 = sbr.rel (%p121) target = $region12
      $region11: #{tpu_custom_call.1} parent=5 // pred_region
        %s125 = ssub.s32 %s17, 1
      $region12: #{tpu_custom_call.1} parent=5 // pred_fallthru
        _
      %p126 = scmp.lt.s32.totalorder %s17, 2
      // Predicated region
      $region13: #{tpu_custom_call.1} parent=5 // pred_check
        %p127 = pneg %p126
      $region14: #{tpu_custom_call.1} parent=5 // pred_check_branch
        %129 = sbr.rel (%p127) target = $region16
      $region15: #{tpu_custom_call.1} parent=5 // pred_region
        // Predicated region
        $region17: #{tpu_custom_call.1} parent=15 // pred_check
          %p130 = pneg %p51
        $region18: #{tpu_custom_call.1} parent=15 // pred_check_branch
          %132 = sbr.rel (%p130) target = $region20
        $region19: #{tpu_custom_call.1} parent=15 // pred_region
          %s133 = sand.u32 %s41, 1
          %s134 = scalar_lea.sflag [#allocation3], %s133
          %s135 = sand.u32 %s41, 1
          %s136 = smul.addr %s135, 32
          %s137 = scalar_lea.vmem [#allocation2], %s136
          %s138 = smul.u32 4, %s24
          %s140 = ssub.s32 512, 512
          %141 = vsyncadd %s134, %s140
          %s142 = sadd.s32 %s25, %s138
          %s143 = smul.addr %s142, 128
          %s144 = scalar_lea.hbm %s0, %s143
          %s145 = sshll.u32 %s137, 4
          %s146 = int_to_ptr.vmem [resolvable:$true] %s145
          %151 = dma.hbm_to_vmem [thread:$0]  %s144, 512, %s146, %s134, 128, 128, 8
        $region20: #{tpu_custom_call.1} parent=15 // pred_fallthru
          _
        // Predicated region
        $region21: #{tpu_custom_call.1} parent=15 // pred_check
          %p152 = pneg %p77
        $region22: #{tpu_custom_call.1} parent=15 // pred_check_branch
          %154 = sbr.rel (%p152) target = $region24
        $region23: #{tpu_custom_call.1} parent=15 // pred_region
          %s155 = sand.u32 %s67, 1
          %s156 = scalar_lea.sflag [#allocation6], %s155
          %s157 = sand.u32 %s67, 1
          %s158 = smul.addr %s157, 512
          %s159 = scalar_lea.vmem [#allocation5], %s158
          %s160 = smul.u32 4, %s24
          %s162 = ssub.s32 8192, 8192
          %163 = vsyncadd %s156, %s162
          %s164 = smul.addr %s160, 16
          %s165 = smul.addr %s164, 128
          %s166 = scalar_lea.hbm %s1, %s165
          %s167 = sshll.u32 %s159, 4
          %s168 = int_to_ptr.vmem [resolvable:$true] %s167
          %173 = dma.hbm_to_vmem [thread:$0]  %s166, 8192, %s168, %s156, 128, 128, 8
        $region24: #{tpu_custom_call.1} parent=15 // pred_fallthru
          _
      $region16: #{tpu_custom_call.1} parent=5 // pred_fallthru
        _
      %p174 = scmp.le.s32.totalorder 1, %s17
      %p175 = scmp.lt.s32.totalorder %s17, 3
      %p176 = pnand %p174, %p175
      %p177 = pneg %p176
      // Predicated region
      $region25: #{tpu_custom_call.1} parent=5 // pred_check
        _
      $region26: #{tpu_custom_call.1} parent=5 // pred_check_branch
        %179 = sbr.rel (%p176) target = $region28
      $region27: #{tpu_custom_call.1} parent=5 // pred_region
        %s180 = ssub.s32 %s17, 1
        %s181 = sand.u32 %s44, 1
        %s182 = scalar_lea.sflag [#allocation3], %s181
        %s183 = sand.u32 %s44, 1
        %s184 = smul.addr %s183, 32
        %s185 = scalar_lea.vmem [#allocation2], %s184
        // Predicated region
        $region29: #{tpu_custom_call.1} parent=27 // pred_check
          %p186 = pneg %p57
        $region30: #{tpu_custom_call.1} parent=27 // pred_check_branch
          %188 = sbr.rel (%p186) target = $region32
        $region31: #{tpu_custom_call.1} parent=27 // pred_region
          %189 = dma.done %s182, 512
        $region32: #{tpu_custom_call.1} parent=27 // pred_fallthru
          _
        %s190 = sand.u32 %s70, 1
        %s191 = scalar_lea.sflag [#allocation6], %s190
        %s192 = sand.u32 %s70, 1
        %s193 = smul.addr %s192, 512
        %s194 = scalar_lea.vmem [#allocation5], %s193
        // Predicated region
        $region33: #{tpu_custom_call.1} parent=27 // pred_check
          %p195 = pneg %p83
        $region34: #{tpu_custom_call.1} parent=27 // pred_check_branch
          %197 = sbr.rel (%p195) target = $region36
        $region35: #{tpu_custom_call.1} parent=27 // pred_region
          %198 = dma.done %s191, 8192
        $region36: #{tpu_custom_call.1} parent=27 // pred_fallthru
          _
        %s199 = sand.u32 %s44, 1
        %s200 = scalar_lea.sflag [#allocation3], %s199
        %s201 = sand.u32 %s44, 1
        %s202 = smul.addr %s201, 32
        %s203 = scalar_lea.vmem [#allocation2], %s202
        %p204 = pneg %p57
        %p205 = pneg %p54
        %s206 = sand.u32 %s70, 1
        %s207 = scalar_lea.sflag [#allocation6], %s206
        %s208 = sand.u32 %s70, 1
        %s209 = smul.addr %s208, 512
        %s210 = scalar_lea.vmem [#allocation5], %s209
        %p211 = pneg %p83
        %p212 = pneg %p80
        %p213 = pneg %p111
        %p214 = pneg %p108
        %s215 = sand.u32 %s98, 1
        %s216 = scalar_lea.sflag [#allocation4], %s215
        %s217 = sand.u32 %s98, 1
        %s218 = smul.addr %s217, 32
        %s219 = scalar_lea.vmem [#allocation7], %s218
        %s220 = smul.u32 4, %s26
        %s221 = smul.u32 4, %s26
        %s222 = smul.u32 4, %s26
        %v223 = vld [vmem:[%s185] sm:$0xff]
        %v224 = vld [vmem:[%s185 + $0x8] sm:$0xff]
        %v225 = vld [vmem:[%s185 + $0x10] sm:$0xff]
        %v226 = vld [vmem:[%s185 + $0x18] sm:$0xff]
        %v227 = vld [vmem:[%s194] sm:$0xff]
        %v228 = vld [vmem:[%s194 + $0x8] sm:$0xff]
        %v229 = vld [vmem:[%s194 + $0x10] sm:$0xff]
        %v230 = vld [vmem:[%s194 + $0x18] sm:$0xff]
        %v231 = vld [vmem:[%s194 + $0x20] sm:$0xff]
        %v232 = vld [vmem:[%s194 + $0x28] sm:$0xff]
        %v233 = vld [vmem:[%s194 + $0x30] sm:$0xff]
        %v234 = vld [vmem:[%s194 + $0x38] sm:$0xff]
        %v235 = vld [vmem:[%s194 + $0x40] sm:$0xff]
        %v236 = vld [vmem:[%s194 + $0x48] sm:$0xff]
        %v237 = vld [vmem:[%s194 + $0x50] sm:$0xff]
        %v238 = vld [vmem:[%s194 + $0x58] sm:$0xff]
        %v239 = vld [vmem:[%s194 + $0x60] sm:$0xff]
        %v240 = vld [vmem:[%s194 + $0x68] sm:$0xff]
        %v241 = vld [vmem:[%s194 + $0x70] sm:$0xff]
        %v242 = vld [vmem:[%s194 + $0x78] sm:$0xff]
        %v243 = vld [vmem:[%s194 + $0x80] sm:$0xff]
        %v244 = vld [vmem:[%s194 + $0x88] sm:$0xff]
        %v245 = vld [vmem:[%s194 + $0x90] sm:$0xff]
        %v246 = vld [vmem:[%s194 + $0x98] sm:$0xff]
        %v247 = vld [vmem:[%s194 + $0xa0] sm:$0xff]
        %v248 = vld [vmem:[%s194 + $0xa8] sm:$0xff]
        %v249 = vld [vmem:[%s194 + $0xb0] sm:$0xff]
        %v250 = vld [vmem:[%s194 + $0xb8] sm:$0xff]
        %v251 = vld [vmem:[%s194 + $0xc0] sm:$0xff]
        %v252 = vld [vmem:[%s194 + $0xc8] sm:$0xff]
        %v253 = vld [vmem:[%s194 + $0xd0] sm:$0xff]
        %v254 = vld [vmem:[%s194 + $0xd8] sm:$0xff]
        %v255 = vld [vmem:[%s194 + $0xe0] sm:$0xff]
        %v256 = vld [vmem:[%s194 + $0xe8] sm:$0xff]
        %v257 = vld [vmem:[%s194 + $0xf0] sm:$0xff]
        %v258 = vld [vmem:[%s194 + $0xf8] sm:$0xff]
        %v259 = vld [vmem:[%s194 + $0x100] sm:$0xff]
        %v260 = vld [vmem:[%s194 + $0x108] sm:$0xff]
        %v261 = vld [vmem:[%s194 + $0x110] sm:$0xff]
        %v262 = vld [vmem:[%s194 + $0x118] sm:$0xff]
        %v263 = vld [vmem:[%s194 + $0x120] sm:$0xff]
        %v264 = vld [vmem:[%s194 + $0x128] sm:$0xff]
        %v265 = vld [vmem:[%s194 + $0x130] sm:$0xff]
        %v266 = vld [vmem:[%s194 + $0x138] sm:$0xff]
        %v267 = vld [vmem:[%s194 + $0x140] sm:$0xff]
        %v268 = vld [vmem:[%s194 + $0x148] sm:$0xff]
        %v269 = vld [vmem:[%s194 + $0x150] sm:$0xff]
        %v270 = vld [vmem:[%s194 + $0x158] sm:$0xff]
        %v271 = vld [vmem:[%s194 + $0x160] sm:$0xff]
        %v272 = vld [vmem:[%s194 + $0x168] sm:$0xff]
        %v273 = vld [vmem:[%s194 + $0x170] sm:$0xff]
        %v274 = vld [vmem:[%s194 + $0x178] sm:$0xff]
        %v275 = vld [vmem:[%s194 + $0x180] sm:$0xff]
        %v276 = vld [vmem:[%s194 + $0x188] sm:$0xff]
        %v277 = vld [vmem:[%s194 + $0x190] sm:$0xff]
        %v278 = vld [vmem:[%s194 + $0x198] sm:$0xff]
        %v279 = vld [vmem:[%s194 + $0x1a0] sm:$0xff]
        %v280 = vld [vmem:[%s194 + $0x1a8] sm:$0xff]
        %v281 = vld [vmem:[%s194 + $0x1b0] sm:$0xff]
        %v282 = vld [vmem:[%s194 + $0x1b8] sm:$0xff]
        %v283 = vld [vmem:[%s194 + $0x1c0] sm:$0xff]
        %v284 = vld [vmem:[%s194 + $0x1c8] sm:$0xff]
        %v285 = vld [vmem:[%s194 + $0x1d0] sm:$0xff]
        %v286 = vld [vmem:[%s194 + $0x1d8] sm:$0xff]
        %v287 = vld [vmem:[%s194 + $0x1e0] sm:$0xff]
        %v288 = vld [vmem:[%s194 + $0x1e8] sm:$0xff]
        %v289 = vld [vmem:[%s194 + $0x1f0] sm:$0xff]
        %v290 = vld [vmem:[%s194 + $0x1f8] sm:$0xff]
        %291 = vmatprep.subr.mxu0 0.0
        %292 = vmatpush1.msra.mxu0 %v242
        %293 = vmatprep.subr.mxu0 0.0
        %294 = vmatpush1.msra.mxu0 %v241
        %295 = vmatprep.subr.mxu0 0.0
        %296 = vmatpush1.msra.mxu0 %v240
        %297 = vmatprep.subr.mxu0 0.0
        %298 = vmatpush1.msra.mxu0 %v239
        %299 = vmatprep.subr.mxu0 0.0
        %300 = vmatpush1.msra.mxu0 %v238
        %301 = vmatprep.subr.mxu0 0.0
        %302 = vmatpush1.msra.mxu0 %v237
        %303 = vmatprep.subr.mxu0 0.0
        %304 = vmatpush1.msra.mxu0 %v236
        %305 = vmatprep.subr.mxu0 0.0
        %306 = vmatpush1.msra.mxu0 %v235
        %307 = vmatprep.subr.mxu0 0.0
        %308 = vmatpush1.msra.mxu0 %v234
        %309 = vmatprep.subr.mxu0 0.0
        %310 = vmatpush1.msra.mxu0 %v233
        %311 = vmatprep.subr.mxu0 0.0
        %312 = vmatpush1.msra.mxu0 %v232
        %313 = vmatprep.subr.mxu0 0.0
        %314 = vmatpush1.msra.mxu0 %v231
        %315 = vmatprep.subr.mxu0 0.0
        %316 = vmatpush1.msra.mxu0 %v230
        %317 = vmatprep.subr.mxu0 0.0
        %318 = vmatpush1.msra.mxu0 %v229
        %319 = vmatprep.subr.mxu0 0.0
        %320 = vmatpush1.msra.mxu0 %v228
        %321 = vmatprep.subr.mxu0 0.0
        %322 = vmatpush1.msra.mxu0 %v227
        %323 = vmatprep.subr.mxu0 0.0
        %324 = vmatpush2.msra.mxu0 0.0
        %325 = vmatprep.subr.mxu0 0.0
        %326 = vmatpush2.msra.mxu0 0.0
        %327 = vmatprep.subr.mxu0 0.0
        %328 = vmatpush2.msra.mxu0 0.0
        %329 = vmatprep.subr.mxu0 0.0
        %330 = vmatpush2.msra.mxu0 0.0
        %331 = vmatprep.subr.mxu0 0.0
        %332 = vmatpush2.msra.mxu0 0.0
        %333 = vmatprep.subr.mxu0 0.0
        %334 = vmatpush2.msra.mxu0 0.0
        %335 = vmatprep.subr.mxu0 0.0
        %336 = vmatpush2.msra.mxu0 0.0
        %337 = vmatprep.subr.mxu0 0.0
        %338 = vmatpush2.msra.mxu0 0.0
        %339 = vmatprep.subr.mxu0 0.0
        %340 = vmatpush2.msra.mxu0 0.0
        %341 = vmatprep.subr.mxu0 0.0
        %342 = vmatpush2.msra.mxu0 0.0
        %343 = vmatprep.subr.mxu0 0.0
        %344 = vmatpush2.msra.mxu0 0.0
        %345 = vmatprep.subr.mxu0 0.0
        %346 = vmatpush2.msra.mxu0 0.0
        %347 = vmatprep.subr.mxu0 0.0
        %348 = vmatpush2.msra.mxu0 0.0
        %349 = vmatprep.subr.mxu0 0.0
        %350 = vmatpush2.msra.mxu0 0.0
        %351 = vmatprep.subr.mxu0 0.0
        %352 = vmatpush2.msra.mxu0 0.0
        %353 = vmatprep.subr.mxu0 0.0
        %354 = vmatpush2.msra.mxu0 0.0
        %355 = vmatprep.mubr.f32.mxu0 0.0
        %356 = vmatmul.mubr.f32.gmra.mxu0 %v223
        %v357 = vpop.f32.mrf.mxu0
        %v358 = vadd.f32 0.0, %v357
        %v359 = vpop.f32.mrf.mxu0
        %360 = vdwg.mxu0
        %361 = vmatprep.subr.mxu0 0.0
        %362 = vmatpush1.msra.mxu0 %v258
        %363 = vmatprep.subr.mxu0 0.0
        %364 = vmatpush1.msra.mxu0 %v257
        %365 = vmatprep.subr.mxu0 0.0
        %366 = vmatpush1.msra.mxu0 %v256
        %367 = vmatprep.subr.mxu0 0.0
        %368 = vmatpush1.msra.mxu0 %v255
        %369 = vmatprep.subr.mxu0 0.0
        %370 = vmatpush1.msra.mxu0 %v254
        %371 = vmatprep.subr.mxu0 0.0
        %372 = vmatpush1.msra.mxu0 %v253
        %373 = vmatprep.subr.mxu0 0.0
        %374 = vmatpush1.msra.mxu0 %v252
        %375 = vmatprep.subr.mxu0 0.0
        %376 = vmatpush1.msra.mxu0 %v251
        %377 = vmatprep.subr.mxu0 0.0
        %378 = vmatpush1.msra.mxu0 %v250
        %379 = vmatprep.subr.mxu0 0.0
        %380 = vmatpush1.msra.mxu0 %v249
        %381 = vmatprep.subr.mxu0 0.0
        %382 = vmatpush1.msra.mxu0 %v248
        %383 = vmatprep.subr.mxu0 0.0
        %384 = vmatpush1.msra.mxu0 %v247
        %385 = vmatprep.subr.mxu0 0.0
        %386 = vmatpush1.msra.mxu0 %v246
        %387 = vmatprep.subr.mxu0 0.0
        %388 = vmatpush1.msra.mxu0 %v245
        %389 = vmatprep.subr.mxu0 0.0
        %390 = vmatpush1.msra.mxu0 %v244
        %391 = vmatprep.subr.mxu0 0.0
        %392 = vmatpush1.msra.mxu0 %v243
        %393 = vmatprep.subr.mxu0 0.0
        %394 = vmatpush2.msra.mxu0 0.0
        %395 = vmatprep.subr.mxu0 0.0
        %396 = vmatpush2.msra.mxu0 0.0
        %397 = vmatprep.subr.mxu0 0.0
        %398 = vmatpush2.msra.mxu0 0.0
        %399 = vmatprep.subr.mxu0 0.0
        %400 = vmatpush2.msra.mxu0 0.0
        %401 = vmatprep.subr.mxu0 0.0
        %402 = vmatpush2.msra.mxu0 0.0
        %403 = vmatprep.subr.mxu0 0.0
        %404 = vmatpush2.msra.mxu0 0.0
        %405 = vmatprep.subr.mxu0 0.0
        %406 = vmatpush2.msra.mxu0 0.0
        %407 = vmatprep.subr.mxu0 0.0
        %408 = vmatpush2.msra.mxu0 0.0
        %409 = vmatprep.subr.mxu0 0.0
        %410 = vmatpush2.msra.mxu0 0.0
        %411 = vmatprep.subr.mxu0 0.0
        %412 = vmatpush2.msra.mxu0 0.0
        %413 = vmatprep.subr.mxu0 0.0
        %414 = vmatpush2.msra.mxu0 0.0
        %415 = vmatprep.subr.mxu0 0.0
        %416 = vmatpush2.msra.mxu0 0.0
        %417 = vmatprep.subr.mxu0 0.0
        %418 = vmatpush2.msra.mxu0 0.0
        %419 = vmatprep.subr.mxu0 0.0
        %420 = vmatpush2.msra.mxu0 0.0
        %421 = vmatprep.subr.mxu0 0.0
        %422 = vmatpush2.msra.mxu0 0.0
        %423 = vmatprep.subr.mxu0 0.0
        %424 = vmatpush2.msra.mxu0 0.0
        %425 = vmatprep.mubr.f32.mxu0 0.0
        %426 = vmatmul.mubr.f32.gmra.mxu0 %v224
        %v427 = vpop.f32.mrf.mxu0
        %v428 = vadd.f32 0.0, %v427
        %v429 = vpop.f32.mrf.mxu0
        %430 = vdwg.mxu0
        %431 = vmatprep.subr.mxu0 0.0
        %432 = vmatpush1.msra.mxu0 %v274
        %433 = vmatprep.subr.mxu0 0.0
        %434 = vmatpush1.msra.mxu0 %v273
        %435 = vmatprep.subr.mxu0 0.0
        %436 = vmatpush1.msra.mxu0 %v272
        %437 = vmatprep.subr.mxu0 0.0
        %438 = vmatpush1.msra.mxu0 %v271
        %439 = vmatprep.subr.mxu0 0.0
        %440 = vmatpush1.msra.mxu0 %v270
        %441 = vmatprep.subr.mxu0 0.0
        %442 = vmatpush1.msra.mxu0 %v269
        %443 = vmatprep.subr.mxu0 0.0
        %444 = vmatpush1.msra.mxu0 %v268
        %445 = vmatprep.subr.mxu0 0.0
        %446 = vmatpush1.msra.mxu0 %v267
        %447 = vmatprep.subr.mxu0 0.0
        %448 = vmatpush1.msra.mxu0 %v266
        %449 = vmatprep.subr.mxu0 0.0
        %450 = vmatpush1.msra.mxu0 %v265
        %451 = vmatprep.subr.mxu0 0.0
        %452 = vmatpush1.msra.mxu0 %v264
        %453 = vmatprep.subr.mxu0 0.0
        %454 = vmatpush1.msra.mxu0 %v263
        %455 = vmatprep.subr.mxu0 0.0
        %456 = vmatpush1.msra.mxu0 %v262
        %457 = vmatprep.subr.mxu0 0.0
        %458 = vmatpush1.msra.mxu0 %v261
        %459 = vmatprep.subr.mxu0 0.0
        %460 = vmatpush1.msra.mxu0 %v260
        %461 = vmatprep.subr.mxu0 0.0
        %462 = vmatpush1.msra.mxu0 %v259
        %463 = vmatprep.subr.mxu0 0.0
        %464 = vmatpush2.msra.mxu0 0.0
        %465 = vmatprep.subr.mxu0 0.0
        %466 = vmatpush2.msra.mxu0 0.0
        %467 = vmatprep.subr.mxu0 0.0
        %468 = vmatpush2.msra.mxu0 0.0
        %469 = vmatprep.subr.mxu0 0.0
        %470 = vmatpush2.msra.mxu0 0.0
        %471 = vmatprep.subr.mxu0 0.0
        %472 = vmatpush2.msra.mxu0 0.0
        %473 = vmatprep.subr.mxu0 0.0
        %474 = vmatpush2.msra.mxu0 0.0
        %475 = vmatprep.subr.mxu0 0.0
        %476 = vmatpush2.msra.mxu0 0.0
        %477 = vmatprep.subr.mxu0 0.0
        %478 = vmatpush2.msra.mxu0 0.0
        %479 = vmatprep.subr.mxu0 0.0
        %480 = vmatpush2.msra.mxu0 0.0
        %481 = vmatprep.subr.mxu0 0.0
        %482 = vmatpush2.msra.mxu0 0.0
        %483 = vmatprep.subr.mxu0 0.0
        %484 = vmatpush2.msra.mxu0 0.0
        %485 = vmatprep.subr.mxu0 0.0
        %486 = vmatpush2.msra.mxu0 0.0
        %487 = vmatprep.subr.mxu0 0.0
        %488 = vmatpush2.msra.mxu0 0.0
        %489 = vmatprep.subr.mxu0 0.0
        %490 = vmatpush2.msra.mxu0 0.0
        %491 = vmatprep.subr.mxu0 0.0
        %492 = vmatpush2.msra.mxu0 0.0
        %493 = vmatprep.subr.mxu0 0.0
        %494 = vmatpush2.msra.mxu0 0.0
        %495 = vmatprep.mubr.f32.mxu0 0.0
        %496 = vmatmul.mubr.f32.gmra.mxu0 %v225
        %v497 = vpop.f32.mrf.mxu0
        %v498 = vadd.f32 0.0, %v497
        %v499 = vpop.f32.mrf.mxu0
        %500 = vdwg.mxu0
        %501 = vmatprep.subr.mxu0 0.0
        %502 = vmatpush1.msra.mxu0 %v290
        %503 = vmatprep.subr.mxu0 0.0
        %504 = vmatpush1.msra.mxu0 %v289
        %505 = vmatprep.subr.mxu0 0.0
        %506 = vmatpush1.msra.mxu0 %v288
        %507 = vmatprep.subr.mxu0 0.0
        %508 = vmatpush1.msra.mxu0 %v287
        %509 = vmatprep.subr.mxu0 0.0
        %510 = vmatpush1.msra.mxu0 %v286
        %511 = vmatprep.subr.mxu0 0.0
        %512 = vmatpush1.msra.mxu0 %v285
        %513 = vmatprep.subr.mxu0 0.0
        %514 = vmatpush1.msra.mxu0 %v284
        %515 = vmatprep.subr.mxu0 0.0
        %516 = vmatpush1.msra.mxu0 %v283
        %517 = vmatprep.subr.mxu0 0.0
        %518 = vmatpush1.msra.mxu0 %v282
        %519 = vmatprep.subr.mxu0 0.0
        %520 = vmatpush1.msra.mxu0 %v281
        %521 = vmatprep.subr.mxu0 0.0
        %522 = vmatpush1.msra.mxu0 %v280
        %523 = vmatprep.subr.mxu0 0.0
        %524 = vmatpush1.msra.mxu0 %v279
        %525 = vmatprep.subr.mxu0 0.0
        %526 = vmatpush1.msra.mxu0 %v278
        %527 = vmatprep.subr.mxu0 0.0
        %528 = vmatpush1.msra.mxu0 %v277
        %529 = vmatprep.subr.mxu0 0.0
        %530 = vmatpush1.msra.mxu0 %v276
        %531 = vmatprep.subr.mxu0 0.0
        %532 = vmatpush1.msra.mxu0 %v275
        %533 = vmatprep.subr.mxu0 0.0
        %534 = vmatpush2.msra.mxu0 0.0
        %535 = vmatprep.subr.mxu0 0.0
        %536 = vmatpush2.msra.mxu0 0.0
        %537 = vmatprep.subr.mxu0 0.0
        %538 = vmatpush2.msra.mxu0 0.0
        %539 = vmatprep.subr.mxu0 0.0
        %540 = vmatpush2.msra.mxu0 0.0
        %541 = vmatprep.subr.mxu0 0.0
        %542 = vmatpush2.msra.mxu0 0.0
        %543 = vmatprep.subr.mxu0 0.0
        %544 = vmatpush2.msra.mxu0 0.0
        %545 = vmatprep.subr.mxu0 0.0
        %546 = vmatpush2.msra.mxu0 0.0
        %547 = vmatprep.subr.mxu0 0.0
        %548 = vmatpush2.msra.mxu0 0.0
        %549 = vmatprep.subr.mxu0 0.0
        %550 = vmatpush2.msra.mxu0 0.0
        %551 = vmatprep.subr.mxu0 0.0
        %552 = vmatpush2.msra.mxu0 0.0
        %553 = vmatprep.subr.mxu0 0.0
        %554 = vmatpush2.msra.mxu0 0.0
        %555 = vmatprep.subr.mxu0 0.0
        %556 = vmatpush2.msra.mxu0 0.0
        %557 = vmatprep.subr.mxu0 0.0
        %558 = vmatpush2.msra.mxu0 0.0
        %559 = vmatprep.subr.mxu0 0.0
        %560 = vmatpush2.msra.mxu0 0.0
        %561 = vmatprep.subr.mxu0 0.0
        %562 = vmatpush2.msra.mxu0 0.0
        %563 = vmatprep.subr.mxu0 0.0
        %564 = vmatpush2.msra.mxu0 0.0
        %565 = vmatprep.mubr.f32.mxu0 0.0
        %566 = vmatmul.mubr.f32.gmra.mxu0 %v226
        %v567 = vpop.f32.mrf.mxu0
        %v568 = vadd.f32 0.0, %v567
        %v569 = vpop.f32.mrf.mxu0
        %570 = vdwg.mxu0
        %571 = vst [vmem:[%s219] sm:$0xff] %v358
        %572 = vst [vmem:[%s219 + $0x8] sm:$0xff] %v428
        %573 = vst [vmem:[%s219 + $0x10] sm:$0xff] %v498
        %574 = vst [vmem:[%s219 + $0x18] sm:$0xff] %v568
        %s575 = sand.u32 %s98, 1
        %s576 = scalar_lea.sflag [#allocation4], %s575
        %s577 = sand.u32 %s98, 1
        %s578 = smul.addr %s577, 32
        %s579 = scalar_lea.vmem [#allocation7], %s578
        // Predicated region
        $region37: #{tpu_custom_call.1} parent=27 // pred_check
          %p580 = pneg %p108
        $region38: #{tpu_custom_call.1} parent=27 // pred_check_branch
          %582 = sbr.rel (%p580) target = $region40
        $region39: #{tpu_custom_call.1} parent=27 // pred_region
          %s583 = smul.u32 4, %s26
          %s585 = ssub.s32 512, 512
          %586 = vsyncadd %s576, %s585
          %s587 = sadd.s32 %s27, %s583
          %s588 = smul.addr %s587, 128
          %s589 = scalar_lea.hbm %s2, %s588
          %s590 = sshll.u32 %s579, 4
          %s591 = int_to_ptr.vmem [resolvable:$true] %s590
          %596 = dma.vmem_to_hbm [thread:$0]  %s591, 512, %s589, %s576, 128, 128, 8
        $region40: #{tpu_custom_call.1} parent=27 // pred_fallthru
          _
      $region28: #{tpu_custom_call.1} parent=5 // pred_fallthru
        _
      %p597 = scmp.le.s32.totalorder 2, %s17
      // Predicated region
      $region41: #{tpu_custom_call.1} parent=5 // pred_check
        %p598 = pneg %p597
      $region42: #{tpu_custom_call.1} parent=5 // pred_check_branch
        %600 = sbr.rel (%p598) target = $region44
      $region43: #{tpu_custom_call.1} parent=5 // pred_region
        %s601 = ssub.s32 %s17, 2
        // Predicated region
        $region45: #{tpu_custom_call.1} parent=43 // pred_check
          %p602 = pneg %p114
        $region46: #{tpu_custom_call.1} parent=43 // pred_check_branch
          %604 = sbr.rel (%p602) target = $region48
        $region47: #{tpu_custom_call.1} parent=43 // pred_region
          %s605 = sand.u32 %s99, 1
          %s606 = scalar_lea.sflag [#allocation4], %s605
          %s607 = sand.u32 %s99, 1
          %s608 = smul.addr %s607, 32
          %s609 = scalar_lea.vmem [#allocation7], %s608
          %610 = dma.done %s606, 512
        $region48: #{tpu_custom_call.1} parent=43 // pred_fallthru
          _
      $region44: #{tpu_custom_call.1} parent=5 // pred_fallthru
        _
    $region6: #{tpu_custom_call.1} parent=1 // loop_footer
      %s21 = sadd.s32 1, %s17
    $region7: #{tpu_custom_call.1} parent=1 // loop_footer_branch
      %16 = sbr.rel target = $region3
    $region8: #{tpu_custom_call.1} parent=1 // loop_exit
      _
    %611 = vsyncpa [#allocation3], 1
    %s612 = scalar_lea.sflag [#allocation3], 1
    %613 = vsyncpa %s612, 1
    %614 = vsyncpa [#allocation6], 1
    %s615 = scalar_lea.sflag [#allocation6], 1
    %616 = vsyncpa %s615, 1
    %617 = vsyncpa [#allocation4], 1
    %s618 = scalar_lea.sflag [#allocation4], 1
    %619 = vsyncpa %s618, 1

</llo_original>
